<compile_context>
chip_gen: v7x
topology: tpu7x:2x2x1
jax: 0.10.0
libtpu: 0.0.40
codegen_flags: <defaults>
</compile_context>

<pallas_src>
import functools
import math

import jax
import jax.numpy as jnp
from jax.experimental import pallas as pl
from jax.experimental.pallas import tpu as pltpu


def _awl_kernel(pred_ref, targ_ref, out_ref, *,
                omega, theta, epsilon, alpha, tile_rows, n, needs_mask):
    y = targ_ref[...].astype(jnp.float32)
    y_hat = pred_ref[...].astype(jnp.float32)

    delta = jnp.abs(y - y_hat)
    e = alpha - y                                  # exponent (alpha - y)

    # --- branch 1: delta < theta ------------------------------------------
    inv_omega = 1.0 / omega
    loss1 = omega * jnp.log(1.0 + jnp.power(delta * inv_omega, e))

    # --- branch 2: delta >= theta ------------------------------------------
    # (theta/epsilon)^e with a constant base -> single exp on the EUP.
    log_toe = math.log(theta / epsilon)            # trace-time constant
    pow_e = jnp.exp(e * log_toe)                   # (theta/eps)**e
    one_plus = 1.0 + pow_e
    # A = omega * 1/(1+p) * e * (theta/eps)^(e-1) * (1/eps)
    #   = (omega/theta) * e * p / (1+p)        (reuses pow_e, one fewer exp)
    A = (omega / theta) * e * pow_e / one_plus
    C = theta * A - omega * jnp.log(one_plus)
    loss2 = A * delta - C

    loss = jnp.where(delta < theta, loss1, loss2)

    # --- mask tail / overhang past the true element count -------------------
    if needs_mask:
        i = pl.program_id(0)
        row = jax.lax.broadcasted_iota(jnp.int32, loss.shape, 0)
        col = jax.lax.broadcasted_iota(jnp.int32, loss.shape, 1)
        idx = (i * tile_rows + row) * 128 + col
        loss = jnp.where(idx < n, loss, 0.0)

    # --- lane-dense partial sum: fold sublane groups with pure VPU adds -----
    partial = jnp.sum(loss.reshape(tile_rows // 8, 8, 128), axis=0)   # (8,128)
    out_ref[0] = partial


def adaptive_wing_loss(pred, target, omega=14.0, theta=0.5, epsilon=1.0,
                       alpha=2.1, tile_rows=1024):
    assert pred.shape == target.shape
    assert theta > 0.0 and epsilon > 0.0

    n = pred.size
    lane, sub = 128, 8
    chunk = lane * sub                              # 1024 elements

    p = pred.reshape(-1)
    t = target.reshape(-1)

    padded = ((n + chunk - 1) // chunk) * chunk
    if padded != n:
        # Rare small pad (<=1023 elems) only when n % 1024 != 0; padded
        # elements are masked out inside the kernel.
        p = jnp.pad(p, (0, padded - n))
        t = jnp.pad(t, (0, padded - n))

    rows = padded // lane                           # multiple of 8
    tile_rows = min(int(tile_rows), rows)           # keep block <= array
    assert tile_rows % sub == 0

    p2 = p.reshape(rows, lane)
    t2 = t.reshape(rows, lane)

    num_blocks = pl.cdiv(rows, tile_rows)
    covered = num_blocks * tile_rows * lane
    needs_mask = covered > n                        # static

    kernel = functools.partial(
        _awl_kernel,
        omega=float(omega), theta=float(theta),
        epsilon=float(epsilon), alpha=float(alpha),
        tile_rows=tile_rows, n=n, needs_mask=needs_mask,
    )

    itemsize = jnp.dtype(pred.dtype).itemsize
    cost = pl.CostEstimate(
        flops=30 * n,
        transcendentals=5 * n,
        bytes_accessed=2 * n * itemsize + num_blocks * sub * lane * 4,
    )

    partials = pl.pallas_call(
        kernel,
        out_shape=jax.ShapeDtypeStruct((num_blocks, sub, lane), jnp.float32),
        grid=(num_blocks,),
        in_specs=[
            pl.BlockSpec((tile_rows, lane), lambda i: (i, 0)),
            pl.BlockSpec((tile_rows, lane), lambda i: (i, 0)),
        ],
        out_specs=pl.BlockSpec((1, sub, lane), lambda i: (i, 0, 0)),
        compiler_params=pltpu.CompilerParams(
            dimension_semantics=("parallel",)),
        cost_estimate=cost,
    )(p2, t2)

    return jnp.sum(partials) / jnp.float32(n)


def adaptive_wing_loss_ref(pred, target, omega=14.0, theta=0.5, epsilon=1.0,
                           alpha=2.1):
    """Pure-JAX reference matching the PyTorch semantics."""
    y = target.astype(jnp.float32)
    y_hat = pred.astype(jnp.float32)
    delta = jnp.abs(y - y_hat)
    e = alpha - y
    loss1 = omega * jnp.log(1.0 + jnp.power(delta / omega, e))
    toe = theta / epsilon
    pow_e = jnp.power(toe, e)
    A = omega * (1.0 / (1.0 + pow_e)) * e * jnp.power(toe, e - 1.0) * (1.0 / epsilon)
    C = theta * A - omega * jnp.log(1.0 + pow_e)
    loss2 = A * delta - C
    loss = jnp.where(delta < theta, loss1, loss2)
    return jnp.mean(loss)


if __name__ == "__main__":
    key = jax.random.PRNGKey(0)
    k1, k2 = jax.random.split(key)
    B, N, H, W = 2, 4, 16, 16
    # Heatmap-style inputs in [0, 1) so (alpha - y) stays positive, as in the
    # module's intended usage.
    pred = jax.random.uniform(k1, (B, N, H, W), dtype=jnp.float32)
    target = jax.random.uniform(k2, (B, N, H, W), dtype=jnp.float32)

    out = adaptive_wing_loss(pred, target)
    out = jax.block_until_ready(out)

    ref = adaptive_wing_loss_ref(pred, target)
    assert jnp.allclose(out, ref, rtol=1e-4, atol=1e-5), (out, ref)

    print("KERNEL_OK")
</pallas_src>

<mosaic_0001>
module attributes {stable_mosaic.version = 11 : i64} {
  func.func @_awl_kernel(%arg0: i32, %arg1: memref<16x128xf32, #tpu.memory_space<vmem>>, %arg2: memref<16x128xf32, #tpu.memory_space<vmem>>, %arg3: memref<1x8x128xf32, #tpu.memory_space<vmem>>) attributes {dimension_semantics = [#tpu.dimension_semantics<parallel>], iteration_bounds = array<i64: 1>, scalar_prefetch = 0 : i64, scratch_operands = 0 : i64, tpu.core_type = #tpu.core_type<tc>, window_params = [{transform_indices = @transform_0, window_bounds = array<i64: 16, 128>}, {transform_indices = @transform_1, window_bounds = array<i64: 16, 128>}, {transform_indices = @transform_2, window_bounds = array<i64: 1, 8, 128>}]} {
    %c0 = arith.constant 0 : index
    %c0_0 = arith.constant 0 : index
    %0 = vector.load %arg2[%c0, %c0_0] : memref<16x128xf32, #tpu.memory_space<vmem>>, vector<16x128xf32>
    %c0_1 = arith.constant 0 : index
    %c0_2 = arith.constant 0 : index
    %1 = vector.load %arg1[%c0_1, %c0_2] : memref<16x128xf32, #tpu.memory_space<vmem>>, vector<16x128xf32>
    %2 = arith.subf %0, %1 : vector<16x128xf32>
    %3 = math.absf %2 : vector<16x128xf32>
    %cst = arith.constant 2.100000e+00 : f32
    %4 = vector.broadcast %cst : f32 to vector<16x128xf32>
    %5 = arith.subf %4, %0 : vector<16x128xf32>
    %cst_3 = arith.constant 0.0714285746 : f32
    %6 = vector.broadcast %cst_3 : f32 to vector<16x128xf32>
    %7 = arith.mulf %3, %6 : vector<16x128xf32>
    %8 = math.powf %7, %5 : vector<16x128xf32>
    %cst_4 = arith.constant 1.000000e+00 : f32
    %9 = vector.broadcast %cst_4 : f32 to vector<16x128xf32>
    %10 = arith.addf %9, %8 : vector<16x128xf32>
    %11 = math.log %10 : vector<16x128xf32>
    %cst_5 = arith.constant 1.400000e+01 : f32
    %12 = vector.broadcast %cst_5 : f32 to vector<16x128xf32>
    %13 = arith.mulf %12, %11 : vector<16x128xf32>
    %cst_6 = arith.constant -0.693147182 : f32
    %14 = vector.broadcast %cst_6 : f32 to vector<16x128xf32>
    %15 = arith.mulf %5, %14 : vector<16x128xf32>
    %16 = math.exp %15 : vector<16x128xf32>
    %cst_7 = arith.constant 1.000000e+00 : f32
    %17 = vector.broadcast %cst_7 : f32 to vector<16x128xf32>
    %18 = arith.addf %17, %16 : vector<16x128xf32>
    %cst_8 = arith.constant 2.800000e+01 : f32
    %19 = vector.broadcast %cst_8 : f32 to vector<16x128xf32>
    %20 = arith.mulf %19, %5 : vector<16x128xf32>
    %21 = arith.mulf %20, %16 : vector<16x128xf32>
    %22 = arith.divf %21, %18 : vector<16x128xf32>
    %cst_9 = arith.constant 5.000000e-01 : f32
    %23 = vector.broadcast %cst_9 : f32 to vector<16x128xf32>
    %24 = arith.mulf %23, %22 : vector<16x128xf32>
    %25 = math.log %18 : vector<16x128xf32>
    %cst_10 = arith.constant 1.400000e+01 : f32
    %26 = vector.broadcast %cst_10 : f32 to vector<16x128xf32>
    %27 = arith.mulf %26, %25 : vector<16x128xf32>
    %28 = arith.subf %24, %27 : vector<16x128xf32>
    %29 = arith.mulf %22, %3 : vector<16x128xf32>
    %30 = arith.subf %29, %28 : vector<16x128xf32>
    %cst_11 = arith.constant 5.000000e-01 : f32
    %31 = vector.broadcast %cst_11 : f32 to vector<16x128xf32>
    %32 = arith.cmpf olt, %3, %31 : vector<16x128xf32>
    %33 = arith.select %32, %13, %30 : vector<16x128xi1>, vector<16x128xf32>
    %34 = vector.shape_cast %33 : vector<16x128xf32> to vector<2x8x128xf32>
    %cst_12 = arith.constant dense<0.000000e+00> : vector<8x128xf32>
    %35 = vector.multi_reduction <add>, %34, %cst_12 [0] : vector<2x8x128xf32> to vector<8x128xf32>
    %c0_13 = arith.constant 0 : index
    %c0_14 = arith.constant 0 : index
    %c0_15 = arith.constant 0 : index
    %36 = vector.load %arg3[%c0_13, %c0_14, %c0_15] : memref<1x8x128xf32, #tpu.memory_space<vmem>>, vector<1x8x128xf32>
    %37 = vector.shape_cast %36 : vector<1x8x128xf32> to vector<8x128xf32>
    %38 = vector.shape_cast %35 : vector<8x128xf32> to vector<1x8x128xf32>
    tpu.vector_store %arg3[%c0_13, %c0_14, %c0_15], %38 {strides = array<i32>} : memref<1x8x128xf32, #tpu.memory_space<vmem>>, vector<1x8x128xf32>,
    return
  }
  func.func @transform_0(%arg0: i32) -> (i32, i32) {
    %c0_i32 = arith.constant 0 : i32
    %c0_i32_0 = arith.constant 0 : i32
    return %arg0, %c0_i32 : i32, i32
  }
  func.func @transform_1(%arg0: i32) -> (i32, i32) {
    %c0_i32 = arith.constant 0 : i32
    %c0_i32_0 = arith.constant 0 : i32
    return %arg0, %c0_i32 : i32, i32
  }
  func.func @transform_2(%arg0: i32) -> (i32, i32, i32) {
    %c0_i32 = arith.constant 0 : i32
    %c0_i32_0 = arith.constant 0 : i32
    %c0_i32_1 = arith.constant 0 : i32
    return %arg0, %c0_i32, %c0_i32_0 : i32, i32, i32
  }
}

</mosaic_0001>

<llo_original>
// kernel: tpu_custom_call.1
$region0: #{tpu_custom_call.1}
  #allocation0 [shape = 'u32[]', space=smem, size = 0x4, offset = 0x4, fixed_abs, tag = 'smem constant byte address 0x4 - core index']
  #allocation1 [shape = 'u32[144,128]{1,0:T(1,128)}', space=vmem, size = 0x12000, scoped, tag = 'internal scratch']
  %s0 = inlined_call_operand.hbm [shape: f32[16,128], index: 0, kind: input, shape index: {}]
  %s1 = inlined_call_operand.hbm [shape: f32[16,128], index: 1, kind: input, shape index: {}]
  %s2 = inlined_call_operand.hbm [shape: f32[1,8,128], index: 2, kind: output, shape index: {}]
  %s3 = sld [smem:[#allocation0]]
  $region26: #{tpu_custom_call.1} parent=0
    _
  %s5 = ssub.s32 1, %s3
  %s6 = scalar_select 0, %s5, %s3
  $region1: #{tpu_custom_call.1} parent=0
    #allocation2 [shape = 'u8[8192]{0}', space=vmem, size = 0x2000, scoped, tag = 'input window, operand 0, single buffered']
    #allocation3 [shape = 's32[1]{0}', space=sflag, size = 0x4, scoped, tag = 'scoped memory for tpu_custom_call.1']
    #allocation4 [shape = 's32[1]{0}', space=sflag, size = 0x4, scoped, tag = 'scoped memory for tpu_custom_call.1']
    #allocation5 [shape = 'u8[8192]{0}', space=vmem, size = 0x2000, scoped, tag = 'input window, operand 1, single buffered']
    #allocation6 [shape = 's32[1]{0}', space=sflag, size = 0x4, scoped, tag = 'scoped memory for tpu_custom_call.1']
    #allocation7 [shape = 'u8[4096]{0}', space=vmem, size = 0x1000, scoped, tag = 'output window, operand 0, single buffered']
    %7 = vsyncpa [#allocation3], 0
    %8 = vsyncpa [#allocation6], 0
    %9 = vsyncpa [#allocation4], 0
    // Predicated region
    $region2: #{tpu_custom_call.1} parent=1 // pred_check
      _
    $region3: #{tpu_custom_call.1} parent=1 // pred_check_branch
      %11 = sbr.rel (0) target = $region5
    $region4: #{tpu_custom_call.1} parent=1 // pred_region
      %s13 = ssub.s32 256, 256
      %14 = vsyncadd [#allocation3], %s13
      %s15 = sshll.u32 [#allocation2], 4
      %s16 = int_to_ptr.vmem [resolvable:$true] %s15
      %21 = dma.hbm_to_vmem [thread:$0]  %s0, 256, %s16, [#allocation3], 128, 128, 8
    $region5: #{tpu_custom_call.1} parent=1 // pred_fallthru
      _
    // Predicated region
    $region6: #{tpu_custom_call.1} parent=1 // pred_check
      _
    $region7: #{tpu_custom_call.1} parent=1 // pred_check_branch
      %23 = sbr.rel (0) target = $region9
    $region8: #{tpu_custom_call.1} parent=1 // pred_region
      %s25 = ssub.s32 256, 256
      %26 = vsyncadd [#allocation6], %s25
      %s27 = sshll.u32 [#allocation5], 4
      %s28 = int_to_ptr.vmem [resolvable:$true] %s27
      %33 = dma.hbm_to_vmem [thread:$0]  %s1, 256, %s28, [#allocation6], 128, 128, 8
    $region9: #{tpu_custom_call.1} parent=1 // pred_fallthru
      _
    // Predicated region
    $region10: #{tpu_custom_call.1} parent=1 // pred_check
      _
    $region11: #{tpu_custom_call.1} parent=1 // pred_check_branch
      %35 = sbr.rel (0) target = $region13
    $region12: #{tpu_custom_call.1} parent=1 // pred_region
      %36 = dma.done [#allocation3], 256
    $region13: #{tpu_custom_call.1} parent=1 // pred_fallthru
      _
    // Predicated region
    $region14: #{tpu_custom_call.1} parent=1 // pred_check
      _
    $region15: #{tpu_custom_call.1} parent=1 // pred_check_branch
      %38 = sbr.rel (0) target = $region17
    $region16: #{tpu_custom_call.1} parent=1 // pred_region
      %39 = dma.done [#allocation6], 256
    $region17: #{tpu_custom_call.1} parent=1 // pred_fallthru
      _
    %v40 = vld [vmem:[#allocation5] sm:$0xff]
    %v41 = vld [vmem:[#allocation5 + $0x8] sm:$0xff]
    %v42 = vld [vmem:[#allocation2] sm:$0xff]
    %v43 = vld [vmem:[#allocation2 + $0x8] sm:$0xff]
    %v44 = vsub.f32 %v40, %v42
    %v45 = vsub.f32 %v41, %v43
    %v46 = vand.u32 2147483647, %v44
    %v47 = vand.u32 2147483647, %v45
    %v48 = vsub.f32 2.1, %v40
    %v49 = vsub.f32 2.1, %v41
    %v50 = vmul.f32 %v46, 0.071428575
    %v51 = vmul.f32 %v47, 0.071428575
    %v52 = vpow.f32 %v50, %v48
    %v53 = vpow.f32 %v51, %v49
    %v54 = vadd.f32 %v52, 1.0
    %v55 = vadd.f32 %v53, 1.0
    %v56 = vlog2.pop %v54
    %v57 = vmul.f32 %v56, 0.6931472
    %v58 = vlog2.pop %v55
    %v59 = vmul.f32 %v58, 0.6931472
    %v60 = vmul.f32 %v57, 14.0
    %v61 = vmul.f32 %v59, 14.0
    %v62 = vmul.f32 %v48, -0.6931472
    %v63 = vmul.f32 %v49, -0.6931472
    %v64 = vmul.f32 %v62, 1.442695
    %v65 = vpow.pop %v64
    %v66 = vmul.f32 %v63, 1.442695
    %v67 = vpow.pop %v66
    %v68 = vadd.f32 %v65, 1.0
    %v69 = vadd.f32 %v67, 1.0
    %v70 = vmul.f32 %v48, 28.0
    %v71 = vmul.f32 %v49, 28.0
    %v72 = vmul.f32 %v70, %v65
    %v73 = vmul.f32 %v71, %v67
    %v74 = vrcp.pop %v68
    %v75 = vmul.f32 %v72, %v74
    %v76 = vrcp.pop %v69
    %v77 = vmul.f32 %v73, %v76
    %v78 = vmul.f32 %v75, 0.5
    %v79 = vmul.f32 %v77, 0.5
    %v80 = vlog2.pop %v68
    %v81 = vmul.f32 %v80, 0.6931472
    %v82 = vlog2.pop %v69
    %v83 = vmul.f32 %v82, 0.6931472
    %v84 = vmul.f32 %v81, 14.0
    %v85 = vmul.f32 %v83, 14.0
    %v86 = vsub.f32 %v78, %v84
    %v87 = vsub.f32 %v79, %v85
    %v88 = vmul.f32 %v75, %v46
    %v89 = vmul.f32 %v77, %v47
    %v90 = vsub.f32 %v88, %v86
    %v91 = vsub.f32 %v89, %v87
    %vm92 = vcmp.lt.f32.partialorder %v46, 0.5
    %vm93 = vcmp.lt.f32.partialorder %v47, 0.5
    %v94 = vsel %vm92, %v60, %v90
    %v95 = vsel %vm93, %v61, %v91
    %v96 = vadd.f32 %v94, %v95
    %97 = vst [vmem:[#allocation7] sm:$0xff] %v96
    // Predicated region
    $region18: #{tpu_custom_call.1} parent=1 // pred_check
      _
    $region19: #{tpu_custom_call.1} parent=1 // pred_check_branch
      %99 = sbr.rel (0) target = $region21
    $region20: #{tpu_custom_call.1} parent=1 // pred_region
      %s101 = ssub.s32 128, 128
      %102 = vsyncadd [#allocation4], %s101
      %s104 = sshll.u32 [#allocation7], 4
      %s105 = int_to_ptr.vmem [resolvable:$true] %s104
      %107 = dma.vmem_to_hbm [thread:$0]  %s105, 128, %s2, [#allocation4]
    $region21: #{tpu_custom_call.1} parent=1 // pred_fallthru
      _
    // Predicated region
    $region22: #{tpu_custom_call.1} parent=1 // pred_check
      _
    $region23: #{tpu_custom_call.1} parent=1 // pred_check_branch
      %109 = sbr.rel (0) target = $region25
    $region24: #{tpu_custom_call.1} parent=1 // pred_region
      %110 = dma.done [#allocation4], 128
    $region25: #{tpu_custom_call.1} parent=1 // pred_fallthru
      _
    %111 = vsyncpa [#allocation3], 1
    %112 = vsyncpa [#allocation6], 1
    %113 = vsyncpa [#allocation4], 1

</llo_original>
